<compile_context>
chip_gen: v7x
topology: tpu7x:2x2x1
jax: 0.10.0
libtpu: 0.0.40
codegen_flags: <defaults>
</compile_context>

<pallas_src>
import functools

import jax
import jax.numpy as jnp
from jax.experimental import pallas as pl
from jax.experimental.pallas import tpu as pltpu

HIDDEN = 128
_TN_CAP = 8192                     # per-tile row cap (≥ roofline knee on v7x at D=32)


def _round_up(a, b):
    return (a + b - 1) // b * b


def _vmem_budgets():
    """Generation-aware scoped-VMEM limit and the budget for the x pipeline."""
    phys = None
    try:
        phys = getattr(pltpu.get_tpu_info(), "vmem_capacity_bytes", None)
    except Exception:
        phys = None
    if not phys:
        phys = 64 * 1024 * 1024    # conservative default (v7x per-TC physical)
    vmem_limit = max(32 * 1024 * 1024, min(int(phys) * 3 // 4, 96 * 1024 * 1024))
    return vmem_limit, vmem_limit // 2


def _select_tile_rows(d, x_itemsize, c_itemsize, tile_budget, max_block_n):
    """Largest row-tile (multiple of 128) fitting the per-generation VMEM budget."""
    # Per-row bytes: double-buffered x tile + optional in-kernel cast copy
    # + (row, 128) f32 hidden intermediate + double-buffered f32 score lane.
    per_row = 2 * d * x_itemsize + d * c_itemsize + HIDDEN * 4 + 2 * 4
    # VMEM-resident operands (conservatively doubled for pipeline buffers).
    fixed = 2 * (d * HIDDEN * c_itemsize + 2 * HIDDEN * 4)
    avail = max(tile_budget - fixed, per_row * 128)
    tn = min(avail // per_row, max_block_n, _TN_CAP)
    return int(max((tn // 128) * 128, 128))


def _hidden_scores(x, w1, b1, w2t, compute_dtype):
    """relu(x @ W1 + b1) contracted against w2^T -> lane-dense (1, rows) scores."""
    if x.dtype != compute_dtype:
        x = x.astype(compute_dtype)     # in-kernel cast: no extra HBM traffic
    h = jnp.dot(x, w1, preferred_element_type=jnp.float32)   # MXU, f32 accumulation
    h = jnp.maximum(h + b1, 0.0)
    # TODO(synk): Dropout(p=0.2) is identity in eval mode; training-mode dropout
    # (pltpu.prng_random_bits mask) intentionally omitted.
    # Contract the 128-wide hidden dim of h with w2^T (q@k^T-style dot_general)
    # so the scores land lane-dense as (1, rows) instead of a (rows, 1) column.
    return jax.lax.dot_general(w2t, h, (((1,), (1,)), ((), ())),
                               preferred_element_type=jnp.float32)


def _fused_kernel(x_ref, w1_ref, b1_ref, w2t_ref, o_ref, *, compute_dtype):
    """Single-tile path: raw scores + exact softmax in one kernel."""
    s = _hidden_scores(x_ref[...], w1_ref[...], b1_ref[...], w2t_ref[...], compute_dtype)
    m = jnp.max(s, axis=1, keepdims=True)
    e = jnp.exp(s - m)
    o_ref[...] = e * pl.reciprocal(jnp.sum(e, axis=1, keepdims=True), approx=False)


def _scores_kernel(x_ref, w1_ref, b1_ref, w2t_ref, s_ref, *, n_valid, compute_dtype):
    """Tiled path: per-tile raw scores, written lane-dense as a (1, TN) row."""
    s = _hidden_scores(x_ref[...], w1_ref[...], b1_ref[...], w2t_ref[...], compute_dtype)
    # Columns past n_valid correspond to undefined rows of the ragged last x
    # block (and output padding); mask them to -inf so exp(.) = 0 in the softmax.
    tn = s.shape[1]
    col = jax.lax.broadcasted_iota(jnp.int32, s.shape, 1) + pl.program_id(0) * tn
    s_ref[...] = jnp.where(col < n_valid, s, -jnp.inf)


def _softmax_kernel(s_ref, o_ref):
    """Exact softmax over the full lane-dense (1, N_pad) score row."""
    s = s_ref[...]
    m = jnp.max(s, axis=1, keepdims=True)
    e = jnp.exp(s - m)
    o_ref[...] = e * pl.reciprocal(jnp.sum(e, axis=1, keepdims=True), approx=False)


def attention_layer_forward(x, w1, b1, w2, b2=None, *,
                            compute_dtype=jnp.float32, max_block_n=_TN_CAP):
    """x: (N, D). Returns softmax attention weights of shape (1, N), float32."""
    n, d = x.shape
    hidden = w1.shape[1]
    cdt = jnp.dtype(compute_dtype)
    vmem_limit, tile_budget = _vmem_budgets()

    # Wrapper-side layout plumbing on the SMALL operands only. x itself is left
    # untouched: no pad, no cast (each would be an extra full HBM round trip).
    w1_c = w1.astype(cdt)
    b1_f = b1.reshape(1, hidden).astype(jnp.float32)
    w2t = w2.reshape(1, hidden).astype(jnp.float32)          # (128, 1) -> (1, 128)
    del b2  # cancels exactly in the softmax: softmax(s + b2) == softmax(s)

    tn = _select_tile_rows(d, x.dtype.itemsize, cdt.itemsize, tile_budget, max_block_n)
    num_tiles = pl.cdiv(n, tn)

    if num_tiles == 1:
        # Natural AGREE case (small/medium N): one fused kernel, one launch,
        # no intermediate HBM round trip of the score row.
        return pl.pallas_call(
            functools.partial(_fused_kernel, compute_dtype=cdt),
            out_shape=jax.ShapeDtypeStruct((1, n), jnp.float32),
            in_specs=[pl.BlockSpec(memory_space=pltpu.MemorySpace.VMEM)] * 4,
            out_specs=pl.BlockSpec(memory_space=pltpu.MemorySpace.VMEM),
            compiler_params=pltpu.CompilerParams(vmem_limit_bytes=vmem_limit),
        )(x, w1_c, b1_f, w2t)

    # Pass 1: tiled, parallel score computation. x streams in (TN, D) blocks
    # (ragged last block handled by the -inf mask); W1/b1/w2^T stay VMEM-resident.
    n_pad = num_tiles * tn
    scores = pl.pallas_call(
        functools.partial(_scores_kernel, n_valid=n, compute_dtype=cdt),
        out_shape=jax.ShapeDtypeStruct((1, n_pad), jnp.float32),
        grid=(num_tiles,),
        in_specs=[
            pl.BlockSpec((tn, d), lambda i: (i, 0)),        # x streamed tile-by-tile
            pl.BlockSpec((d, hidden), lambda i: (0, 0)),    # W1 VMEM-resident
            pl.BlockSpec((1, hidden), lambda i: (0, 0)),    # b1 VMEM-resident
            pl.BlockSpec((1, hidden), lambda i: (0, 0)),    # w2^T VMEM-resident
        ],
        out_specs=pl.BlockSpec((1, tn), lambda i: (0, i)),  # lane-dense score row
        compiler_params=pltpu.CompilerParams(
            dimension_semantics=("parallel",),
            vmem_limit_bytes=vmem_limit,
        ),
    )(x, w1_c, b1_f, w2t)

    # Pass 2: exact softmax over the (1, N_pad) score row (N_pad*4 bytes of VMEM).
    # TODO(synk): for N beyond a few million this single block would itself need
    # a tiled two-pass max/sum; unnecessary at the sizes this module targets.
    weights = pl.pallas_call(
        _softmax_kernel,
        out_shape=jax.ShapeDtypeStruct((1, n_pad), jnp.float32),
        in_specs=[pl.BlockSpec(memory_space=pltpu.MemorySpace.VMEM)],
        out_specs=pl.BlockSpec(memory_space=pltpu.MemorySpace.VMEM),
        compiler_params=pltpu.CompilerParams(vmem_limit_bytes=vmem_limit),
    )(scores)
    return weights[:, :n]


def init_params(key, embedding_dim):
    """Deterministic synthetic init (uniform like nn.Linear's default range)."""
    k1, k2, k3, k4 = jax.random.split(key, 4)
    bound1 = 1.0 / jnp.sqrt(embedding_dim)
    bound2 = 1.0 / jnp.sqrt(HIDDEN)
    w1 = jax.random.uniform(k1, (embedding_dim, HIDDEN), jnp.float32, -bound1, bound1)
    b1 = jax.random.uniform(k2, (1, HIDDEN), jnp.float32, -bound1, bound1)
    w2 = jax.random.uniform(k3, (HIDDEN, 1), jnp.float32, -bound2, bound2)
    b2 = jax.random.uniform(k4, (1, 1), jnp.float32, -bound2, bound2)
    return w1, b1, w2, b2


def _reference(x, w1, b1, w2, b2):
    h = jnp.maximum(x @ w1 + b1, 0.0)
    s = (h @ w2 + b2).reshape(1, -1)
    return jax.nn.softmax(s, axis=1)


if __name__ == "__main__":
    N, D = 8, 32  # 8 group members, embedding_dim = 32 (AGREE group attention)
    key = jax.random.PRNGKey(0)
    kx, kp = jax.random.split(key)
    x = jax.random.normal(kx, (N, D), dtype=jnp.float32)
    w1, b1, w2, b2 = init_params(kp, D)

    # f32 fused single-tile path at the module's natural (tiny) size.
    weight = jax.block_until_ready(attention_layer_forward(x, w1, b1, w2, b2))
    assert weight.shape == (1, N)
    assert jnp.allclose(jnp.sum(weight), 1.0, atol=1e-5)
    assert jnp.allclose(weight, _reference(x, w1, b1, w2, b2), atol=1e-5, rtol=1e-5)

    # Larger N with a forced small tile: exercises the tiled grid, the ragged
    # (unpadded) last x block, the -inf mask and the separate softmax pass.
    N2 = 1000
    x2 = jax.random.normal(jax.random.PRNGKey(1), (N2, D), dtype=jnp.float32)
    weight2 = jax.block_until_ready(
        attention_layer_forward(x2, w1, b1, w2, b2, max_block_n=256))
    assert weight2.shape == (1, N2)
    assert jnp.allclose(jnp.sum(weight2), 1.0, atol=1e-5)
    assert jnp.allclose(weight2, _reference(x2, w1, b1, w2, b2), atol=1e-5, rtol=1e-4)

    # Same N via the default (budget-sized, fused single-tile) path.
    weight2f = jax.block_until_ready(attention_layer_forward(x2, w1, b1, w2, b2))
    assert weight2f.shape == (1, N2)
    assert jnp.allclose(weight2f, weight2, atol=1e-6)

    # bf16-fed MXU path (in-kernel cast, no extra HBM traffic); softmax stays f32.
    weight_bf16 = jax.block_until_ready(
        attention_layer_forward(x, w1, b1, w2, b2, compute_dtype=jnp.bfloat16))
    assert weight_bf16.shape == (1, N)
    assert jnp.allclose(jnp.sum(weight_bf16), 1.0, atol=1e-3)
    assert jnp.allclose(weight_bf16, weight, atol=0.05)

    # bf16 through the tiled path as well.
    weight2_bf16 = jax.block_until_ready(
        attention_layer_forward(x2, w1, b1, w2, b2,
                                compute_dtype=jnp.bfloat16, max_block_n=256))
    assert jnp.allclose(weight2_bf16, weight2, atol=0.05)

    print("KERNEL_OK")
</pallas_src>

<mosaic_0001>
module attributes {stable_mosaic.version = 11 : i64} {
  func.func @_fused_kernel(%arg0: memref<8x32xf32, #tpu.memory_space<vmem>>, %arg1: memref<32x128xf32, #tpu.memory_space<vmem>>, %arg2: memref<1x128xf32, #tpu.memory_space<vmem>>, %arg3: memref<1x128xf32, #tpu.memory_space<vmem>>, %arg4: memref<1x8xf32, #tpu.memory_space<vmem>>) attributes {dimension_semantics = [], scalar_prefetch = 0 : i64, scratch_operands = 0 : i64, tpu.core_type = #tpu.core_type<tc>} {
    %c0 = arith.constant 0 : index
    %c0_0 = arith.constant 0 : index
    %0 = vector.load %arg0[%c0, %c0_0] : memref<8x32xf32, #tpu.memory_space<vmem>>, vector<8x32xf32>
    %c0_1 = arith.constant 0 : index
    %c0_2 = arith.constant 0 : index
    %1 = vector.load %arg1[%c0_1, %c0_2] : memref<32x128xf32, #tpu.memory_space<vmem>>, vector<32x128xf32>
    %c0_3 = arith.constant 0 : index
    %c0_4 = arith.constant 0 : index
    %2 = vector.load %arg2[%c0_3, %c0_4] : memref<1x128xf32, #tpu.memory_space<vmem>>, vector<1x128xf32>
    %c0_5 = arith.constant 0 : index
    %c0_6 = arith.constant 0 : index
    %3 = vector.load %arg3[%c0_5, %c0_6] : memref<1x128xf32, #tpu.memory_space<vmem>>, vector<1x128xf32>
    %cst = arith.constant dense<0.000000e+00> : vector<8x128xf32>
    %4 = tpu.matmul %0, %1, %cst {dimension_numbers = #tpu.dot_dimension_numbers<[1], [0], [0], [1], [0, 0, 1, 1], [], []>} : vector<8x32xf32>, vector<32x128xf32>, vector<8x128xf32> -> vector<8x128xf32>
    %5 = vector.broadcast %2 : vector<1x128xf32> to vector<8x128xf32>
    %6 = arith.addf %4, %5 : vector<8x128xf32>
    %cst_7 = arith.constant 0.000000e+00 : f32
    %7 = vector.broadcast %cst_7 : f32 to vector<8x128xf32>
    %8 = arith.maximumf %6, %7 : vector<8x128xf32>
    %cst_8 = arith.constant dense<0.000000e+00> : vector<1x8xf32>
    %9 = tpu.matmul %3, %8, %cst_8 {dimension_numbers = #tpu.dot_dimension_numbers<[1], [1], [0], [0], [0, 0, 1, 0], [], []>} : vector<1x128xf32>, vector<8x128xf32>, vector<1x8xf32> -> vector<1x8xf32>
    %cst_9 = arith.constant dense<0xFF800000> : vector<1xf32>
    %10 = vector.multi_reduction <maximumf>, %9, %cst_9 [1] : vector<1x8xf32> to vector<1xf32>
    %11 = vector.shape_cast %10 : vector<1xf32> to vector<1x1xf32>
    %12 = vector.broadcast %11 : vector<1x1xf32> to vector<1x8xf32>
    %13 = arith.subf %9, %12 : vector<1x8xf32>
    %14 = math.exp %13 : vector<1x8xf32>
    %cst_10 = arith.constant dense<0.000000e+00> : vector<1xf32>
    %15 = vector.multi_reduction <add>, %14, %cst_10 [1] : vector<1x8xf32> to vector<1xf32>
    %16 = vector.shape_cast %15 : vector<1xf32> to vector<1x1xf32>
    %17 = tpu.reciprocal %16 : vector<1x1xf32> -> vector<1x1xf32>
    %18 = vector.broadcast %17 : vector<1x1xf32> to vector<1x8xf32>
    %19 = arith.mulf %14, %18 : vector<1x8xf32>
    %c0_11 = arith.constant 0 : index
    %c0_12 = arith.constant 0 : index
    %20 = vector.load %arg4[%c0_11, %c0_12] : memref<1x8xf32, #tpu.memory_space<vmem>>, vector<1x8xf32>
    tpu.vector_store %arg4[%c0_11, %c0_12], %19 {strides = array<i32>} : memref<1x8xf32, #tpu.memory_space<vmem>>, vector<1x8xf32>,
    return
  }
}

</mosaic_0001>

<llo_original>
// kernel: tpu_custom_call.1
$region0: #{tpu_custom_call.1}
  #allocation0 [shape = 'u32[]', space=smem, size = 0x4, offset = 0x4, fixed_abs, tag = 'smem constant byte address 0x4 - core index']
  #allocation1 [shape = 'u32[144,128]{1,0:T(1,128)}', space=vmem, size = 0x12000, scoped, tag = 'internal scratch']
  %s0 = inlined_call_operand.hbm [shape: f32[8,32], index: 0, kind: input, shape index: {}]
  %s1 = inlined_call_operand.hbm [shape: f32[32,128], index: 1, kind: input, shape index: {}]
  %s2 = inlined_call_operand.vmem [shape: f32[1,128], index: 2, kind: input, shape index: {}]
  %s3 = inlined_call_operand.vmem [shape: f32[1,128], index: 3, kind: input, shape index: {}]
  %s4 = inlined_call_operand.hbm [shape: f32[1,8], index: 4, kind: output, shape index: {}]
  %s5 = sld [smem:[#allocation0]]
  $region34: #{tpu_custom_call.1} parent=0
    _
  %s7 = ssub.s32 1, %s5
  %s8 = scalar_select 0, %s7, %s5
  $region1: #{tpu_custom_call.1} parent=0
    #allocation2 [shape = 'u8[4096]{0}', space=vmem, size = 0x1000, scoped, tag = 'input window, operand 0, single buffered']
    #allocation3 [shape = 's32[1]{0}', space=sflag, size = 0x4, scoped, tag = 'scoped memory for tpu_custom_call.1']
    #allocation4 [shape = 's32[1]{0}', space=sflag, size = 0x4, scoped, tag = 'scoped memory for tpu_custom_call.1']
    #allocation5 [shape = 'u8[16384]{0}', space=vmem, size = 0x4000, scoped, tag = 'input window, operand 1, single buffered']
    #allocation6 [shape = 's32[1]{0}', space=sflag, size = 0x4, scoped, tag = 'scoped memory for tpu_custom_call.1']
    #allocation7 [shape = 'u8[512]{0}', space=vmem, size = 0x400, scoped, tag = 'output window, operand 0, single buffered']
    %9 = vsyncpa [#allocation3], 0
    %10 = vsyncpa [#allocation6], 0
    %11 = vsyncpa [#allocation4], 0
    // Predicated region
    $region2: #{tpu_custom_call.1} parent=1 // pred_check
      _
    $region3: #{tpu_custom_call.1} parent=1 // pred_check_branch
      %13 = sbr.rel (0) target = $region5
    $region4: #{tpu_custom_call.1} parent=1 // pred_region
      %s15 = ssub.s32 128, 128
      %16 = vsyncadd [#allocation3], %s15
      %s18 = sshll.u32 [#allocation2], 4
      %s19 = int_to_ptr.vmem [resolvable:$true] %s18
      %21 = dma.hbm_to_vmem [thread:$0]  %s0, 128, %s19, [#allocation3]
    $region5: #{tpu_custom_call.1} parent=1 // pred_fallthru
      _
    // Predicated region
    $region6: #{tpu_custom_call.1} parent=1 // pred_check
      _
    $region7: #{tpu_custom_call.1} parent=1 // pred_check_branch
      %23 = sbr.rel (0) target = $region9
    $region8: #{tpu_custom_call.1} parent=1 // pred_region
      %s25 = ssub.s32 512, 512
      %26 = vsyncadd [#allocation6], %s25
      %s27 = sshll.u32 [#allocation5], 4
      %s28 = int_to_ptr.vmem [resolvable:$true] %s27
      %33 = dma.hbm_to_vmem [thread:$0]  %s1, 512, %s28, [#allocation6], 128, 128, 8
    $region9: #{tpu_custom_call.1} parent=1 // pred_fallthru
      _
    // Predicated region
    $region10: #{tpu_custom_call.1} parent=1 // pred_check
      _
    $region11: #{tpu_custom_call.1} parent=1 // pred_check_branch
      %35 = sbr.rel (0) target = $region13
    $region12: #{tpu_custom_call.1} parent=1 // pred_region
      _
    $region13: #{tpu_custom_call.1} parent=1 // pred_fallthru
      _
    // Predicated region
    $region14: #{tpu_custom_call.1} parent=1 // pred_check
      _
    $region15: #{tpu_custom_call.1} parent=1 // pred_check_branch
      %37 = sbr.rel (0) target = $region17
    $region16: #{tpu_custom_call.1} parent=1 // pred_region
      _
    $region17: #{tpu_custom_call.1} parent=1 // pred_fallthru
      _
    // Predicated region
    $region18: #{tpu_custom_call.1} parent=1 // pred_check
      _
    $region19: #{tpu_custom_call.1} parent=1 // pred_check_branch
      %39 = sbr.rel (0) target = $region21
    $region20: #{tpu_custom_call.1} parent=1 // pred_region
      %40 = dma.done [#allocation3], 128
    $region21: #{tpu_custom_call.1} parent=1 // pred_fallthru
      _
    // Predicated region
    $region22: #{tpu_custom_call.1} parent=1 // pred_check
      _
    $region23: #{tpu_custom_call.1} parent=1 // pred_check_branch
      %42 = sbr.rel (0) target = $region25
    $region24: #{tpu_custom_call.1} parent=1 // pred_region
      %43 = dma.done [#allocation6], 512
    $region25: #{tpu_custom_call.1} parent=1 // pred_fallthru
      _
    %v44 = vld [vmem:[#allocation2] sm:$0xff]
    %v45 = vld [vmem:[#allocation5] sm:$0xff]
    %v46 = vld [vmem:[#allocation5 + $0x8] sm:$0xff]
    %v47 = vld [vmem:[#allocation5 + $0x10] sm:$0xff]
    %v48 = vld [vmem:[#allocation5 + $0x18] sm:$0xff]
    %v49 = vld [vmem:[%s2] sm:$0x1]
    %v50 = vld [vmem:[%s3] sm:$0x1]
    %v52 = vlaneseq
    %v53 = vshrl.u32 %v52, 7
    %v54 = vsub.s32 0, %v53
    %v55 = vrot.slane %v49, %v54
    %vm57 = vcmask 261120
    %v59 = vsel %vm57, %v44, 0
    %61 = vmatprep.subr.mxu0 0.0
    %62 = vmatpush1.msra.mxu0 %v45
    %63 = vmatprep.subr.mxu0 0.0
    %64 = vmatpush1.msra.mxu0 %v46
    %65 = vmatprep.subr.mxu0 0.0
    %66 = vmatpush1.msra.mxu0 %v47
    %67 = vmatprep.subr.mxu0 0.0
    %68 = vmatpush1.msra.mxu0 %v48
    %69 = vmatprep.subr.mxu0 0.0
    %70 = vmatpush1.msra.mxu0 0.0
    %71 = vmatprep.subr.mxu0 0.0
    %72 = vmatpush1.msra.mxu0 0.0
    %73 = vmatprep.subr.mxu0 0.0
    %74 = vmatpush1.msra.mxu0 0.0
    %75 = vmatprep.subr.mxu0 0.0
    %76 = vmatpush1.msra.mxu0 0.0
    %77 = vmatprep.subr.mxu0 0.0
    %78 = vmatpush1.msra.mxu0 0.0
    %79 = vmatprep.subr.mxu0 0.0
    %80 = vmatpush1.msra.mxu0 0.0
    %81 = vmatprep.subr.mxu0 0.0
    %82 = vmatpush1.msra.mxu0 0.0
    %83 = vmatprep.subr.mxu0 0.0
    %84 = vmatpush1.msra.mxu0 0.0
    %85 = vmatprep.subr.mxu0 0.0
    %86 = vmatpush1.msra.mxu0 0.0
    %87 = vmatprep.subr.mxu0 0.0
    %88 = vmatpush1.msra.mxu0 0.0
    %89 = vmatprep.subr.mxu0 0.0
    %90 = vmatpush1.msra.mxu0 0.0
    %91 = vmatprep.subr.mxu0 0.0
    %92 = vmatpush1.msra.mxu0 0.0
    %93 = vmatprep.subr.mxu0 0.0
    %94 = vmatpush1.msra.mxu0 0.0
    %95 = vmatprep.subr.mxu0 0.0
    %96 = vmatpush1.msra.mxu0 0.0
    %97 = vmatprep.subr.mxu0 0.0
    %98 = vmatpush1.msra.mxu0 0.0
    %99 = vmatprep.subr.mxu0 0.0
    %100 = vmatpush1.msra.mxu0 0.0
    %101 = vmatprep.subr.mxu0 0.0
    %102 = vmatpush1.msra.mxu0 0.0
    %103 = vmatprep.subr.mxu0 0.0
    %104 = vmatpush1.msra.mxu0 0.0
    %105 = vmatprep.subr.mxu0 0.0
    %106 = vmatpush1.msra.mxu0 0.0
    %107 = vmatprep.subr.mxu0 0.0
    %108 = vmatpush1.msra.mxu0 0.0
    %109 = vmatprep.subr.mxu0 0.0
    %110 = vmatpush1.msra.mxu0 0.0
    %111 = vmatprep.subr.mxu0 0.0
    %112 = vmatpush1.msra.mxu0 0.0
    %113 = vmatprep.subr.mxu0 0.0
    %114 = vmatpush1.msra.mxu0 0.0
    %115 = vmatprep.subr.mxu0 0.0
    %116 = vmatpush1.msra.mxu0 0.0
    %117 = vmatprep.subr.mxu0 0.0
    %118 = vmatpush1.msra.mxu0 0.0
    %119 = vmatprep.subr.mxu0 0.0
    %120 = vmatpush1.msra.mxu0 0.0
    %121 = vmatprep.subr.mxu0 0.0
    %122 = vmatpush1.msra.mxu0 0.0
    %123 = vmatprep.subr.mxu0 0.0
    %124 = vmatpush1.msra.mxu0 0.0
    %125 = vmatprep.mubr.f32.mxu0 0.0
    %126 = vmatmul.mubr.f32.gmra.mrb[0].mxu0 %v59
    %v127 = vpop.f32.mrb[0].mxu0
    %v128 = vadd.f32 %v55, %v127
    %v129 = vpop.f32.mrb[0].mxu0
    %130 = vdwg.mxu0
    %v131 = vmax.f32 %v128, 0.0
    %132 = vmatprep.subr.mxu0 0.0
    %133 = vmatpush1.xpose.msra.mxu0 %v131
    %134 = vmatprep.subr.mxu0 0.0
    %135 = vmatpush1.xpose.msra.mxu0 0.0
    %136 = vmatprep.subr.mxu0 0.0
    %137 = vmatpush1.xpose.msra.mxu0 0.0
    %138 = vmatprep.subr.mxu0 0.0
    %139 = vmatpush1.xpose.msra.mxu0 0.0
    %140 = vmatprep.subr.mxu0 0.0
    %141 = vmatpush1.xpose.msra.mxu0 0.0
    %142 = vmatprep.subr.mxu0 0.0
    %143 = vmatpush1.xpose.msra.mxu0 0.0
    %144 = vmatprep.subr.mxu0 0.0
    %145 = vmatpush1.xpose.msra.mxu0 0.0
    %146 = vmatprep.subr.mxu0 0.0
    %147 = vmatpush1.xpose.msra.mxu0 0.0
    %148 = vmatprep.subr.mxu0 0.0
    %149 = vmatpush1.xpose.msra.mxu0 0.0
    %150 = vmatprep.subr.mxu0 0.0
    %151 = vmatpush1.xpose.msra.mxu0 0.0
    %152 = vmatprep.subr.mxu0 0.0
    %153 = vmatpush1.xpose.msra.mxu0 0.0
    %154 = vmatprep.subr.mxu0 0.0
    %155 = vmatpush1.xpose.msra.mxu0 0.0
    %156 = vmatprep.subr.mxu0 0.0
    %157 = vmatpush1.xpose.msra.mxu0 0.0
    %158 = vmatprep.subr.mxu0 0.0
    %159 = vmatpush1.xpose.msra.mxu0 0.0
    %160 = vmatprep.subr.mxu0 0.0
    %161 = vmatpush1.xpose.msra.mxu0 0.0
    %162 = vmatprep.subr.mxu0 0.0
    %163 = vmatpush1.xpose.msra.mxu0 0.0
    %164 = vmatprep.subr.mxu0 0.0
    %165 = vmatpush1.xpose.msra.mxu0 0.0
    %166 = vmatprep.subr.mxu0 0.0
    %167 = vmatpush1.xpose.msra.mxu0 0.0
    %168 = vmatprep.subr.mxu0 0.0
    %169 = vmatpush1.xpose.msra.mxu0 0.0
    %170 = vmatprep.subr.mxu0 0.0
    %171 = vmatpush1.xpose.msra.mxu0 0.0
    %172 = vmatprep.subr.mxu0 0.0
    %173 = vmatpush1.xpose.msra.mxu0 0.0
    %174 = vmatprep.subr.mxu0 0.0
    %175 = vmatpush1.xpose.msra.mxu0 0.0
    %176 = vmatprep.subr.mxu0 0.0
    %177 = vmatpush1.xpose.msra.mxu0 0.0
    %178 = vmatprep.subr.mxu0 0.0
    %179 = vmatpush1.xpose.msra.mxu0 0.0
    %180 = vmatprep.subr.mxu0 0.0
    %181 = vmatpush1.xpose.msra.mxu0 0.0
    %182 = vmatprep.subr.mxu0 0.0
    %183 = vmatpush1.xpose.msra.mxu0 0.0
    %184 = vmatprep.subr.mxu0 0.0
    %185 = vmatpush1.xpose.msra.mxu0 0.0
    %186 = vmatprep.subr.mxu0 0.0
    %187 = vmatpush1.xpose.msra.mxu0 0.0
    %188 = vmatprep.subr.mxu0 0.0
    %189 = vmatpush1.xpose.msra.mxu0 0.0
    %190 = vmatprep.subr.mxu0 0.0
    %191 = vmatpush1.xpose.msra.mxu0 0.0
    %192 = vmatprep.subr.mxu0 0.0
    %193 = vmatpush1.xpose.msra.mxu0 0.0
    %194 = vmatprep.subr.mxu0 0.0
    %195 = vmatpush1.xpose.msra.mxu0 0.0
    %196 = vmatprep.mubr.f32.mxu0 0.0
    %197 = vmatmul.mubr.f32.gmra.mrb[0].mxu0 %v50
    %v198 = vpop.f32.mrb[0].mxu0
    %v199 = vadd.f32 0.0, %v198
    %v200 = vpop.f32.mrb[0].mxu0
    %201 = vdwg.mxu0
    %vm202 = vcmask 57344
    %v203 = vsel %vm202, %v199, -inf
    %204 = vmax.xlane.f32.xlu0 %v203
    %v205 = vpop.xlane.xlu0 %204
    %v206 = vsub.f32 %v199, %v205
    %v207 = vmul.f32 %v206, 1.442695
    %v208 = vpow.pop %v207
    %v209 = vsel %vm202, %v208, 0.0
    %210 = vadd.xlane.f32.xlu0 %v209
    %v211 = vpop.xlane.xlu0 %210
    %v212 = vrcp.pop %v211
    %v213 = vmul.f32 %v208, %v212
    %214 = vst.msk [vmem:[#allocation7] sm:$0x1] %vm202, %v213
    // Predicated region
    $region26: #{tpu_custom_call.1} parent=1 // pred_check
      _
    $region27: #{tpu_custom_call.1} parent=1 // pred_check_branch
      %216 = sbr.rel (0) target = $region29
    $region28: #{tpu_custom_call.1} parent=1 // pred_region
      %s218 = ssub.s32 16, 16
      %219 = vsyncadd [#allocation4], %s218
      %s221 = sshll.u32 [#allocation7], 4
      %s222 = int_to_ptr.vmem [resolvable:$true] %s221
      %224 = dma.vmem_to_hbm [thread:$0]  %s222, 16, %s4, [#allocation4]
    $region29: #{tpu_custom_call.1} parent=1 // pred_fallthru
      _
    // Predicated region
    $region30: #{tpu_custom_call.1} parent=1 // pred_check
      _
    $region31: #{tpu_custom_call.1} parent=1 // pred_check_branch
      %226 = sbr.rel (0) target = $region33
    $region32: #{tpu_custom_call.1} parent=1 // pred_region
      %227 = dma.done [#allocation4], 16
    $region33: #{tpu_custom_call.1} parent=1 // pred_fallthru
      _
    %228 = vsyncpa [#allocation3], 1
    %229 = vsyncpa [#allocation6], 1
    %230 = vsyncpa [#allocation4], 1

</llo_original>
